<compile_context>
chip_gen: v5e
topology: v5e:2x2
jax: 0.10.0
libtpu: 0.0.40
codegen_flags: <defaults>
</compile_context>

<pallas_src>
import jax
import jax.numpy as jnp
from jax.experimental import pallas as pl
from jax.experimental.pallas import tpu as pltpu

K = 7            # len(w_list) in the reference module
LANES = 128
# ~32K lanes/step => ~0.9 MiB of x per grid step: large enough to amortize the
# ~0.35us per-step pipeline overhead on v5e/v6e/v7x, yet only ~2.3 MiB
# double-buffered (x + out), far below even v7x's 32 MiB default scoped VMEM.
DEFAULT_TILE_N = 32 * 1024


def _mylinear_kernel(w_ref, x_ref, o_ref):
    # w_ref: (K, 1) f32 VMEM   -- lane-broadcast weight column
    # x_ref: (K, TILE_N) f32 VMEM
    # o_ref: (1, TILE_N) f32 VMEM
    #
    # One vmul per vreg (VPU) + one cross-sublane reduce (XLU, otherwise idle
    # slot). No MXU, no per-row slices, no serial MAC dependency chain.
    prod = x_ref[...] * w_ref[...]
    o_ref[...] = jnp.sum(prod, axis=0, keepdims=True)


def mylinear_forward(w, x, tile_n=DEFAULT_TILE_N):
    """w: (K,) float32, x: (K, N) float32 -> (N,) float32 (== torch `self.w @ x`)."""
    assert w.shape == (K,)
    assert x.shape[0] == K
    N = x.shape[1]

    # Clamp the lane tile to the 128-aligned problem size so tiny N runs as a
    # single small block; never pad x in HBM.
    tile_n = max(LANES, min(tile_n, pl.cdiv(N, LANES) * LANES))
    grid = (pl.cdiv(N, tile_n),)

    w_col = w.reshape(K, 1).astype(jnp.float32)   # tiny, stays resident in VMEM

    out = pl.pallas_call(
        _mylinear_kernel,
        out_shape=jax.ShapeDtypeStruct((1, N), jnp.float32),
        grid=grid,
        in_specs=[
            pl.BlockSpec((K, 1), lambda i: (0, 0)),       # w: same block every step
            pl.BlockSpec((K, tile_n), lambda i: (0, i)),  # x: lane tile of N
        ],
        out_specs=pl.BlockSpec((1, tile_n), lambda i: (0, i)),
        compiler_params=pltpu.CompilerParams(
            dimension_semantics=("parallel",)),           # v7x: shard N tiles over 2 TCs
    )(w_col, x)

    return out[0]


if __name__ == "__main__":
    key = jax.random.PRNGKey(0)
    kw, kx = jax.random.split(key)
    # deterministic stand-in for torch.randn(len(w_list)) — shape (7,)
    w = jax.random.normal(kw, (K,), dtype=jnp.float32)

    # Small case matching the module's forward: x (7, 8) -> y (8,)
    x_small = jax.random.normal(kx, (K, 8), dtype=jnp.float32)
    y_small = jax.block_until_ready(mylinear_forward(w, x_small))
    y_small_ref = w @ x_small
    assert y_small.shape == y_small_ref.shape == (8,)
    assert jnp.allclose(y_small, y_small_ref, atol=1e-5, rtol=1e-5)

    # Small ragged case exercising grid > 1 and the masked partial last tile.
    x_rag = jax.random.normal(jax.random.PRNGKey(1), (K, 300), dtype=jnp.float32)
    y_rag = jax.block_until_ready(mylinear_forward(w, x_rag, tile_n=128))
    y_rag_ref = w @ x_rag
    assert y_rag.shape == y_rag_ref.shape == (300,)
    assert jnp.allclose(y_rag, y_rag_ref, atol=1e-5, rtol=1e-5)

    print("KERNEL_OK")
</pallas_src>

<mosaic_0001>
module attributes {stable_mosaic.version = 11 : i64} {
  func.func @_mylinear_kernel(%arg0: i32, %arg1: memref<7x1xf32, #tpu.memory_space<vmem>>, %arg2: memref<7x128xf32, #tpu.memory_space<vmem>>, %arg3: memref<1x128xf32, #tpu.memory_space<vmem>>) attributes {dimension_semantics = [#tpu.dimension_semantics<parallel>], iteration_bounds = array<i64: 1>, scalar_prefetch = 0 : i64, scratch_operands = 0 : i64, tpu.core_type = #tpu.core_type<tc>, window_params = [{pipeline_mode = #tpu.pipeline_mode<synchronous>, transform_indices = @transform_0, window_bounds = array<i64: 7, 1>}, {transform_indices = @transform_1, window_bounds = array<i64: 7, 128>}, {transform_indices = @transform_2, window_bounds = array<i64: 1, 128>}]} {
    %c0 = arith.constant 0 : index
    %c0_0 = arith.constant 0 : index
    %0 = vector.load %arg2[%c0, %c0_0] : memref<7x128xf32, #tpu.memory_space<vmem>>, vector<7x128xf32>
    %c0_1 = arith.constant 0 : index
    %c0_2 = arith.constant 0 : index
    %1 = vector.load %arg1[%c0_1, %c0_2] : memref<7x1xf32, #tpu.memory_space<vmem>>, vector<7x1xf32>
    %2 = vector.broadcast %1 : vector<7x1xf32> to vector<7x128xf32>
    %3 = arith.mulf %0, %2 : vector<7x128xf32>
    %cst = arith.constant dense<0.000000e+00> : vector<128xf32>
    %4 = vector.multi_reduction <add>, %3, %cst [0] : vector<7x128xf32> to vector<128xf32>
    %5 = vector.shape_cast %4 : vector<128xf32> to vector<1x128xf32>
    %c0_3 = arith.constant 0 : index
    %c0_4 = arith.constant 0 : index
    %6 = vector.load %arg3[%c0_3, %c0_4] : memref<1x128xf32, #tpu.memory_space<vmem>>, vector<1x128xf32>
    tpu.vector_store %arg3[%c0_3, %c0_4], %5 {strides = array<i32>} : memref<1x128xf32, #tpu.memory_space<vmem>>, vector<1x128xf32>,
    return
  }
  func.func @transform_0(%arg0: i32) -> (i32, i32) {
    %c0_i32 = arith.constant 0 : i32
    %c0_i32_0 = arith.constant 0 : i32
    %c0_i32_1 = arith.constant 0 : i32
    return %c0_i32, %c0_i32_0 : i32, i32
  }
  func.func @transform_1(%arg0: i32) -> (i32, i32) {
    %c0_i32 = arith.constant 0 : i32
    %c0_i32_0 = arith.constant 0 : i32
    return %c0_i32, %arg0 : i32, i32
  }
  func.func @transform_2(%arg0: i32) -> (i32, i32) {
    %c0_i32 = arith.constant 0 : i32
    %c0_i32_0 = arith.constant 0 : i32
    return %c0_i32, %arg0 : i32, i32
  }
}

</mosaic_0001>

<llo_original>
// kernel: tpu_custom_call.1
$region0: #{tpu_custom_call.1}
  #allocation0 [shape = 'u32[]', space=smem, size = 0x4, offset = 0x4, fixed_abs, tag = 'smem constant byte address 0x4 - core index']
  #allocation1 [shape = 'u32[72,128]{1,0:T(1,128)}', space=vmem, size = 0x9000, scoped, tag = 'internal scratch']
  %s0 = inlined_call_operand.vmem [shape: f32[7,1], index: 0, kind: input, shape index: {}]
  %s1 = inlined_call_operand.vmem [shape: f32[7,8], index: 1, kind: input, shape index: {}]
  %s2 = inlined_call_operand.hbm [shape: f32[1,8], index: 2, kind: output, shape index: {}]
  %s3 = sld [smem:[#allocation0]]
  $region18: #{tpu_custom_call.1} parent=0
    _
  %s5 = ssub.s32 1, %s3
  %s6 = scalar_select 0, %s5, %s3
  $region1: #{tpu_custom_call.1} parent=0
    #allocation2 [shape = 'u8[512]{0}', space=vmem, size = 0x400, scoped, tag = 'output window, operand 0, single buffered']
    #allocation3 [shape = 's32[1]{0}', space=sflag, size = 0x4, scoped, tag = 'scoped memory for tpu_custom_call.1']
    %7 = vsyncpa [#allocation3], 0
    // Predicated region
    $region2: #{tpu_custom_call.1} parent=1 // pred_check
      _
    $region3: #{tpu_custom_call.1} parent=1 // pred_check_branch
      %9 = sbr.rel (0) target = $region5
    $region4: #{tpu_custom_call.1} parent=1 // pred_region
      _
    $region5: #{tpu_custom_call.1} parent=1 // pred_fallthru
      _
    // Predicated region
    $region6: #{tpu_custom_call.1} parent=1 // pred_check
      _
    $region7: #{tpu_custom_call.1} parent=1 // pred_check_branch
      %11 = sbr.rel (0) target = $region9
    $region8: #{tpu_custom_call.1} parent=1 // pred_region
      _
    $region9: #{tpu_custom_call.1} parent=1 // pred_fallthru
      _
    %v12 = vld [vmem:[%s1] sm:$0x7f]
    %v13 = vld [vmem:[%s0] sm:$0x7f]
    %15 = vset.pattern.permute.xlu0 0
    %16 = vperm.xlu0 %15, %v13
    %v17 = vpop.permute.xlu0 %16
    %v19 = vmul.f32 %v12, %v17
    %vm20 = vcmask 1046528
    %v21 = vsel %vm20, %v19, 0.0
    %v22 = vrot.slane %v21, 4
    %v23 = vadd.f32 %v21, %v22
    %v24 = vrot.slane %v23, 2
    %v25 = vadd.f32 %v23, %v24
    %v26 = vrot.slane %v25, 1
    %v27 = vadd.f32 %v25, %v26
    %28 = vst [vmem:[#allocation2] sm:$0x1] %v27
    // Predicated region
    $region10: #{tpu_custom_call.1} parent=1 // pred_check
      _
    $region11: #{tpu_custom_call.1} parent=1 // pred_check_branch
      %30 = sbr.rel (0) target = $region13
    $region12: #{tpu_custom_call.1} parent=1 // pred_region
      %32 = vsyncadd [#allocation3], 0
      %s34 = sshll.u32 [#allocation2], 4
      %s35 = int_to_ptr.vmem [resolvable:$true] %s34
      %s36 = sshll.u32 %s2, 4
      %s37 = int_to_ptr.hbm [resolvable:$true] %s36
      %39 = dma.vmem_to_hbm [thread:$0]  %s35, 16, %s37, [#allocation3]
    $region13: #{tpu_custom_call.1} parent=1 // pred_fallthru
      _
    // Predicated region
    $region14: #{tpu_custom_call.1} parent=1 // pred_check
      _
    $region15: #{tpu_custom_call.1} parent=1 // pred_check_branch
      %41 = sbr.rel (0) target = $region17
    $region16: #{tpu_custom_call.1} parent=1 // pred_region
      %43 = dma.done [#allocation3], 16
    $region17: #{tpu_custom_call.1} parent=1 // pred_fallthru
      _
    %44 = vsyncpa [#allocation3], 1

</llo_original>
